<compile_context>
chip_gen: v5e
topology: v5e:2x2
jax: 0.10.0
libtpu: 0.0.40
codegen_flags: <defaults>
</compile_context>

<pallas_src>
import functools

import jax
import jax.numpy as jnp
import numpy as np
from jax import lax
from jax.experimental import pallas as pl
from jax.experimental.pallas import tpu as pltpu

NUM_CLASSES = 4          # IEMOCAP emotion classes
CLASS_PAD = 128          # lane-dense padded class dimension
TEMPERATURE = 3.0        # MinimumClassConfusionLoss default
TRANSFER_LOSS_RATIO = 0.1


def _vmem_capacity_bytes():
    """Per-core VMEM capacity; conservative 64 MiB fallback (v7x-sized)."""
    try:
        cap = int(pltpu.get_tpu_info().vmem_capacity_bytes)
        if cap >= (16 << 20):
            return cap
    except Exception:
        pass
    return 64 << 20


# ---------------------------------------------------------------------------
# Kernel 1: T-tiled, core-shardable length-masked sum pooling over raw features
# ---------------------------------------------------------------------------
def _masked_sum_pool_kernel(feats_ref, len_ref, part_ref, acc_ref, *,
                            nt_per_shard):
    c = pl.program_id(0)          # TensorCore shard of the T reduction
    t = pl.program_id(1)          # T tile within the shard
    B, TT, D = feats_ref.shape

    @pl.when(t == 0)
    def _init():
        acc_ref[...] = jnp.zeros_like(acc_ref)

    # Global timestep index of each row in this tile.
    t0 = (c * nt_per_shard + t) * TT
    idx = t0 + lax.broadcasted_iota(jnp.int32, (B, TT, 1), 1)      # (B,TT,1)
    valid = idx < len_ref[...]                                      # (B,TT,1)
    # where-select (not multiply) so garbage rows of a partial final tile and
    # pad_sequence zero-padding contribute exactly 0 (NaN-safe); f32 accumulate.
    x = jnp.where(valid, feats_ref[...].astype(jnp.float32), 0.0)   # (B,TT,D)
    acc_ref[...] += jnp.sum(x, axis=1)                              # (B,D) VPU

    @pl.when(t == nt_per_shard - 1)
    def _flush():
        part_ref[...] = acc_ref[...]                                # (B,D) slab


# ---------------------------------------------------------------------------
# Kernel 2 (tiny, runs once): combine partials -> mean -> projector ->
#   classifier -> loss (CE | MCC, static choice) -> argmax
# ---------------------------------------------------------------------------
def _head_kernel(part_ref, len_ref, lab_ref, wp_ref, bp_ref, wo_ref, bo_ref,
                 logits_ref, loss_ref, pred_ref, *,
                 compute_ce, num_classes, temperature, transfer_ratio):
    B, Cp = logits_ref.shape

    # Combine per-core partial sums and finish the masked mean.
    # TODO(synk): zero-length utterances are clamped to len>=1 (pooled = 0)
    # instead of producing the NaN the PyTorch reference would emit.
    inv_len = 1.0 / jnp.maximum(len_ref[...].astype(jnp.float32), 1.0)  # (B,1)
    pooled = jnp.sum(part_ref[...], axis=0) * inv_len                   # (B,D)

    # Projector -> classifier (single batched MXU matmul each, f32 acc).
    h = jnp.dot(pooled, wp_ref[...],
                preferred_element_type=jnp.float32) + bp_ref[...]
    logits = jnp.dot(h, wo_ref[...],
                     preferred_element_type=jnp.float32) + bo_ref[...]
    logits_ref[...] = logits                                             # (B,Cp)

    lane = lax.broadcasted_iota(jnp.int32, (B, Cp), 1)                   # (B,Cp)
    lane_row = lax.broadcasted_iota(jnp.int32, (1, Cp), 1)               # (1,Cp)
    valid_row = lane_row < num_classes                                   # (1,Cp)
    cmask_row = valid_row.astype(jnp.float32)
    neg_big = jnp.float32(-1e30)
    masked = jnp.where(valid_row, logits, neg_big)                       # (B,Cp)

    # argmax over real classes (first max index, like torch .max indices)
    mval = jnp.max(masked, axis=1, keepdims=True)                        # (B,1)
    cand = jnp.where(masked >= mval, lane, Cp)
    pred_ref[...] = jnp.min(cand, axis=1, keepdims=True).astype(jnp.int32)

    if compute_ce:
        # nn.CrossEntropyLoss (mean over batch)
        lse = mval + jnp.log(
            jnp.sum(jnp.exp(masked - mval), axis=1, keepdims=True))
        onehot = (lane == lab_ref[...]).astype(jnp.float32)              # (B,Cp)
        true_logit = jnp.sum(onehot * logits, axis=1, keepdims=True)
        ce = lse - true_logit                                            # (B,1)
        loss_ref[...] = jnp.sum(ce, axis=0, keepdims=True) / B           # (1,1)
    else:
        # MinimumClassConfusionLoss via (B,Cp)/(1,Cp) reductions only
        # (the (C,C) confusion matrix is never materialized):
        #   ccm[j,k]       = sum_b pw[b,j] p[b,k]
        #   rowsum(ccm)[k] = sum_b pw[b,k]           (softmax rows sum to 1)
        #   colsum(ccm)[k] = sum_b (sum_j pw[b,j]) p[b,k]
        #   diag(ccm)[k]   = sum_b pw[b,k] p[b,k]
        ls = jnp.where(valid_row, logits / temperature, neg_big)
        m = jnp.max(ls, axis=1, keepdims=True)
        e = jnp.exp(ls - m) * cmask_row                                  # (B,Cp)
        p = e / jnp.sum(e, axis=1, keepdims=True)                        # pads==0
        H = -jnp.sum(p * jnp.log(p + 1e-5), axis=1, keepdims=True)       # (B,1)
        w = 1.0 + jnp.exp(-H)
        w = (B * w) / jnp.sum(w, axis=0, keepdims=True)                  # (B,1)
        pw = p * w                                                       # (B,Cp)
        rowsum = jnp.sum(pw, axis=0, keepdims=True)                      # (1,Cp)
        rowsum = jnp.where(valid_row, rowsum, 1.0)                       # 0/0 guard
        wsum = jnp.sum(pw, axis=1, keepdims=True)                        # (B,1)
        colsum = jnp.sum(wsum * p, axis=0, keepdims=True)                # (1,Cp)
        diag = jnp.sum(pw * p, axis=0, keepdims=True)                    # (1,Cp)
        total = jnp.sum(cmask_row * colsum / rowsum, axis=1, keepdims=True)
        trace = jnp.sum(cmask_row * diag / rowsum, axis=1, keepdims=True)
        loss_ref[...] = transfer_ratio * (total - trace) / num_classes   # (1,1)


# ---------------------------------------------------------------------------
# Python wrapper == DownstreamExpert.forward (compute part)
# ---------------------------------------------------------------------------
def expert_forward(params, features, features_len, labels, is_train):
    """features: (B, T, D) zero-padded (pad_sequence semantics), any float
    dtype (bf16 recommended for the HBM-bound read); returns
    (loss, predicted_classid, padded logits)."""
    w_proj, b_proj, w_post, b_post = params
    B, T, D = features.shape
    P = w_proj.shape[1]
    Cp = w_post.shape[1]

    itemsize = jnp.dtype(features.dtype).itemsize
    sub = {1: 32, 2: 16, 4: 8}.get(itemsize, 8)       # sublane packing multiple

    # ---- T-tile sizing from the chip's VMEM budget --------------------------
    vmem_cap = _vmem_capacity_bytes()
    nbuf = 3 if vmem_cap >= (96 << 20) else 2         # deeper prefetch if roomy
    row_in = B * D * itemsize                         # one timestep, input dtype
    row_f32 = B * D * 4                               # one timestep, f32 temps
    fixed = 4 << 20                                   # acc/lens/out/compiler slack
    usable = int(0.75 * vmem_cap) - fixed
    # nbuf pipelined input buffers + ~3 full-tile f32 temporaries in flight.
    tt_cap = max(sub, (usable // (nbuf * row_in + 3 * row_f32)) // sub * sub)

    if T <= tt_cap:
        TT, NC, nt_per_shard = T, 1, 1
    else:
        TT = tt_cap
        n_tiles = -(-T // TT)                         # cdiv; last tile may be partial
        if n_tiles % 2 == 0:
            NC, nt_per_shard = 2, n_tiles // 2        # shard T across TCs (v7x)
        else:
            NC, nt_per_shard = 1, n_tiles             # keep all block starts in-bounds

    lens3 = features_len.astype(jnp.int32).reshape(B, 1, 1)
    lens2 = features_len.astype(jnp.int32).reshape(B, 1)
    labels2 = labels.astype(jnp.int32).reshape(B, 1)

    feat_index_map = lambda c, t: (0, c * nt_per_shard + t, 0)
    feat_spec = pl.BlockSpec((B, TT, D), feat_index_map)
    if nbuf == 3 and nt_per_shard >= 3:
        try:  # extra prefetch depth on the single mem-bound stream (v5e/v6e)
            feat_spec = pl.BlockSpec((B, TT, D), feat_index_map,
                                     pipeline_mode=pl.Buffered(3))
        except TypeError:
            feat_spec = pl.BlockSpec((B, TT, D), feat_index_map)

    # VMEM accounting mirrors what the pipeline actually allocates.
    feat_block = B * TT * D * itemsize
    required1 = (nbuf * feat_block            # pipelined feature buffers
                 + 3 * B * TT * D * 4         # in-kernel f32 temporaries
                 + 2 * B * 4                  # lens blocks (double-buffered)
                 + 2 * B * D * 4              # partial output blocks
                 + B * D * 4                  # accumulator scratch
                 + (2 << 20))                 # compiler-internal slack
    vmem_limit1 = int(min(max(required1, 16 << 20), int(0.8 * vmem_cap)))

    partial = pl.pallas_call(
        functools.partial(_masked_sum_pool_kernel, nt_per_shard=nt_per_shard),
        out_shape=jax.ShapeDtypeStruct((NC, B, D), jnp.float32),
        grid_spec=pltpu.PrefetchScalarGridSpec(
            num_scalar_prefetch=0,
            grid=(NC, nt_per_shard),
            in_specs=[feat_spec,
                      pl.BlockSpec((B, 1, 1), lambda c, t: (0, 0, 0))],
            out_specs=pl.BlockSpec((None, B, D), lambda c, t: (c, 0, 0)),
            scratch_shapes=[pltpu.VMEM((B, D), jnp.float32)],
        ),
        compiler_params=pltpu.CompilerParams(
            dimension_semantics=("parallel", "arbitrary"),
            vmem_limit_bytes=vmem_limit1),
        cost_estimate=pl.CostEstimate(
            flops=int(3 * B * T * D),
            transcendentals=0,
            bytes_accessed=int(B * T * D * itemsize + NC * B * D * 4 + B * 4)),
    )(features, lens3)

    head = functools.partial(
        _head_kernel, compute_ce=bool(is_train), num_classes=NUM_CLASSES,
        temperature=TEMPERATURE, transfer_ratio=TRANSFER_LOSS_RATIO)

    weight_bytes = 4 * (D * P + P + P * Cp + Cp)
    required2 = (2 * (NC * B * D * 4 + 2 * B * 4 + weight_bytes)
                 + 2 * (B * Cp * 4 + 4 + B * 4) + (2 << 20))
    vmem_limit2 = int(min(max(required2, 16 << 20), int(0.8 * vmem_cap)))

    logits, loss, pred = pl.pallas_call(
        head,
        out_shape=(jax.ShapeDtypeStruct((B, Cp), jnp.float32),
                   jax.ShapeDtypeStruct((1, 1), jnp.float32),
                   jax.ShapeDtypeStruct((B, 1), jnp.int32)),
        grid_spec=pltpu.PrefetchScalarGridSpec(
            num_scalar_prefetch=0,
            grid=(1,),
            in_specs=[pl.BlockSpec((NC, B, D), lambda i: (0, 0, 0)),
                      pl.BlockSpec((B, 1),     lambda i: (0, 0)),
                      pl.BlockSpec((B, 1),     lambda i: (0, 0)),
                      pl.BlockSpec((D, P),     lambda i: (0, 0)),
                      pl.BlockSpec((1, P),     lambda i: (0, 0)),
                      pl.BlockSpec((P, Cp),    lambda i: (0, 0)),
                      pl.BlockSpec((1, Cp),    lambda i: (0, 0))],
            out_specs=(pl.BlockSpec((B, Cp), lambda i: (0, 0)),
                       pl.BlockSpec((1, 1),  lambda i: (0, 0)),
                       pl.BlockSpec((B, 1),  lambda i: (0, 0))),
        ),
        compiler_params=pltpu.CompilerParams(
            dimension_semantics=("arbitrary",),
            vmem_limit_bytes=vmem_limit2),
        cost_estimate=pl.CostEstimate(
            flops=int(2 * B * D * P + 2 * B * P * Cp),
            transcendentals=int(4 * B * Cp),
            bytes_accessed=int(weight_bytes + NC * B * D * 4 + B * Cp * 4)),
    )(partial, lens2, labels2, w_proj, b_proj, w_post, b_post)

    return loss[0, 0], pred[:, 0], logits


# ---------------------------------------------------------------------------
# Pure-JAX reference (mirrors the PyTorch module's math)
# ---------------------------------------------------------------------------
def reference_forward(params, features, features_len, labels, is_train):
    w_proj, b_proj, w_post, b_post = params
    h = features.astype(jnp.float32) @ w_proj + b_proj[0]
    mask = (jnp.arange(features.shape[1])[None, :]
            < features_len[:, None]).astype(jnp.float32)
    pooled = jnp.sum(h * mask[..., None], axis=1) / features_len[:, None].astype(
        jnp.float32)
    logits = pooled @ w_post[:, :NUM_CLASSES] + b_post[0, :NUM_CLASSES]
    if is_train:
        logp = jax.nn.log_softmax(logits, axis=-1)
        loss = -jnp.mean(logp[jnp.arange(labels.shape[0]), labels])
    else:
        p = jax.nn.softmax(logits / TEMPERATURE, axis=-1)
        H = -jnp.sum(p * jnp.log(p + 1e-5), axis=1)
        w = 1.0 + jnp.exp(-H)
        w = (labels.shape[0] * w / jnp.sum(w))[:, None]
        ccm = (p * w).T @ p
        ccm = ccm / jnp.sum(ccm, axis=1)
        mcc = (jnp.sum(ccm) - jnp.trace(ccm)) / NUM_CLASSES
        loss = TRANSFER_LOSS_RATIO * mcc
    pred = jnp.argmax(logits, axis=-1)
    return loss, pred, logits


if __name__ == "__main__":
    # Small shapes consistent with the module's forward.
    B, T, UPSTREAM_DIM, PROJECTOR_DIM = 2, 16, 32, 64

    key = jax.random.PRNGKey(0)
    k_feat, k_wp, k_bp, k_wo, k_bo = jax.random.split(key, 5)

    features = jax.random.normal(k_feat, (B, T, UPSTREAM_DIM), dtype=jnp.float32)
    features_len = jnp.array([T, T - 5], dtype=jnp.int32)
    # zero out padded timesteps (mimics pad_sequence; kernel masks them anyway)
    tmask = (jnp.arange(T)[None, :] < features_len[:, None]).astype(jnp.float32)
    features = features * tmask[..., None]
    # bf16 feature reads halve HBM traffic on the mem-bound pooling stream.
    features = features.astype(jnp.bfloat16)
    labels = jnp.array([1, 3], dtype=jnp.int32)

    # Deterministic parameter init (projector + post_net classifier, class dim
    # padded to CLASS_PAD lanes with zeros).
    w_proj = 0.1 * jax.random.normal(k_wp, (UPSTREAM_DIM, PROJECTOR_DIM),
                                     dtype=jnp.float32)
    b_proj = 0.1 * jax.random.normal(k_bp, (1, PROJECTOR_DIM), dtype=jnp.float32)
    w_post = jnp.zeros((PROJECTOR_DIM, CLASS_PAD), dtype=jnp.float32)
    w_post = w_post.at[:, :NUM_CLASSES].set(
        0.1 * jax.random.normal(k_wo, (PROJECTOR_DIM, NUM_CLASSES),
                                dtype=jnp.float32))
    b_post = jnp.zeros((1, CLASS_PAD), dtype=jnp.float32)
    b_post = b_post.at[:, :NUM_CLASSES].set(
        0.1 * jax.random.normal(k_bo, (1, NUM_CLASSES), dtype=jnp.float32))

    params = (w_proj, b_proj, w_post, b_post)

    ok = True
    for is_train in (True, False):
        loss, pred, logits = expert_forward(params, features, features_len,
                                            labels, is_train)
        loss = jax.block_until_ready(loss)
        pred = jax.block_until_ready(pred)
        logits = jax.block_until_ready(logits)
        ref_loss, ref_pred, ref_logits = reference_forward(
            params, features, features_len, labels, is_train)
        ok &= np.allclose(np.asarray(loss), np.asarray(ref_loss),
                          rtol=2e-3, atol=2e-5)
        ok &= np.array_equal(np.asarray(pred), np.asarray(ref_pred))
        ok &= np.allclose(np.asarray(logits[:, :NUM_CLASSES]),
                          np.asarray(ref_logits), rtol=2e-3, atol=2e-5)

    if ok:
        print("KERNEL_OK")
    else:
        print("KERNEL_MISMATCH")
</pallas_src>

<mosaic_0001>
module attributes {stable_mosaic.version = 11 : i64} {
  func.func @_masked_sum_pool_kernel(%arg0: i32, %arg1: i32, %arg2: memref<2x16x32xbf16, #tpu.memory_space<vmem>>, %arg3: memref<2x1x1xi32, #tpu.memory_space<vmem>>, %arg4: memref<1x2x32xf32, #tpu.memory_space<vmem>>, %arg5: memref<2x32xf32, #tpu.memory_space<vmem>>) attributes {dimension_semantics = [#tpu.dimension_semantics<parallel>, #tpu.dimension_semantics<arbitrary>], iteration_bounds = array<i64: 1, 1>, scalar_prefetch = 0 : i64, scratch_operands = 1 : i64, tpu.core_type = #tpu.core_type<tc>, window_params = [{transform_indices = @transform_0, window_bounds = array<i64: 2, 16, 32>}, {pipeline_mode = #tpu.pipeline_mode<synchronous>, transform_indices = @transform_1, window_bounds = array<i64: 2, 1, 1>}, {transform_indices = @transform_2, window_bounds = array<i64: 1, 2, 32>}]} {
    %c0_i32 = arith.constant 0 : i32
    %0 = arith.cmpi eq, %arg1, %c0_i32 : i32
    %1 = arith.extui %0 : i1 to i32
    %c0_i32_0 = arith.constant 0 : i32
    %2 = arith.cmpi ne, %1, %c0_i32_0 : i32
    scf.if %2 {
      %cst_13 = arith.constant 0.000000e+00 : f32
      %25 = vector.broadcast %cst_13 : f32 to vector<2x32xf32>
      %c0_14 = arith.constant 0 : index
      %c0_15 = arith.constant 0 : index
      %26 = vector.load %arg5[%c0_14, %c0_15] : memref<2x32xf32, #tpu.memory_space<vmem>>, vector<2x32xf32>
      tpu.vector_store %arg5[%c0_14, %c0_15], %25 {strides = array<i32>} : memref<2x32xf32, #tpu.memory_space<vmem>>, vector<2x32xf32>,
    } else {
    }
    %c1_i32 = arith.constant 1 : i32
    %3 = arith.muli %arg0, %c1_i32 : i32
    %4 = arith.addi %3, %arg1 : i32
    %c16_i32 = arith.constant 16 : i32
    %5 = arith.muli %4, %c16_i32 : i32
    %6 = tpu.iota {dimensions = array<i32: 1>} : vector<2x16x1xi32>
    %7 = vector.broadcast %5 : i32 to vector<2x16x1xi32>
    %8 = arith.addi %7, %6 : vector<2x16x1xi32>
    %c0 = arith.constant 0 : index
    %c0_1 = arith.constant 0 : index
    %c0_2 = arith.constant 0 : index
    %9 = vector.load %arg3[%c0, %c0_1, %c0_2] : memref<2x1x1xi32, #tpu.memory_space<vmem>>, vector<2x1x1xi32>
    %10 = vector.broadcast %9 : vector<2x1x1xi32> to vector<2x16x1xi32>
    %11 = arith.cmpi slt, %8, %10 : vector<2x16x1xi32>
    %c0_3 = arith.constant 0 : index
    %c0_4 = arith.constant 0 : index
    %c0_5 = arith.constant 0 : index
    %12 = vector.load %arg2[%c0_3, %c0_4, %c0_5] : memref<2x16x32xbf16, #tpu.memory_space<vmem>>, vector<2x16x32xbf16>
    %13 = arith.extf %12 : vector<2x16x32xbf16> to vector<2x16x32xf32>
    %cst = arith.constant 0.000000e+00 : f32
    %14 = vector.shape_cast %11 : vector<2x16x1xi1> to vector<2x16x1xi1>
    %15 = vector.broadcast %14 : vector<2x16x1xi1> to vector<2x16x32xi1>
    %16 = vector.broadcast %cst : f32 to vector<2x16x32xf32>
    %17 = arith.select %15, %13, %16 : vector<2x16x32xi1>, vector<2x16x32xf32>
    %c0_6 = arith.constant 0 : index
    %c0_7 = arith.constant 0 : index
    %18 = vector.load %arg5[%c0_6, %c0_7] : memref<2x32xf32, #tpu.memory_space<vmem>>, vector<2x32xf32>
    %cst_8 = arith.constant dense<0.000000e+00> : vector<2x32xf32>
    %19 = vector.multi_reduction <add>, %17, %cst_8 [1] : vector<2x16x32xf32> to vector<2x32xf32>
    %20 = arith.addf %18, %19 : vector<2x32xf32>
    %c0_9 = arith.constant 0 : index
    %c0_10 = arith.constant 0 : index
    %21 = vector.load %arg5[%c0_9, %c0_10] : memref<2x32xf32, #tpu.memory_space<vmem>>, vector<2x32xf32>
    tpu.vector_store %arg5[%c0_9, %c0_10], %20 {strides = array<i32>} : memref<2x32xf32, #tpu.memory_space<vmem>>, vector<2x32xf32>,
    %c0_i32_11 = arith.constant 0 : i32
    %22 = arith.cmpi eq, %arg1, %c0_i32_11 : i32
    %23 = arith.extui %22 : i1 to i32
    %c0_i32_12 = arith.constant 0 : i32
    %24 = arith.cmpi ne, %23, %c0_i32_12 : i32
    scf.if %24 {
      %c0_13 = arith.constant 0 : index
      %c0_14 = arith.constant 0 : index
      %25 = vector.load %arg5[%c0_13, %c0_14] : memref<2x32xf32, #tpu.memory_space<vmem>>, vector<2x32xf32>
      %c0_15 = arith.constant 0 : index
      %c0_16 = arith.constant 0 : index
      %c0_17 = arith.constant 0 : index
      %26 = vector.load %arg4[%c0_15, %c0_16, %c0_17] : memref<1x2x32xf32, #tpu.memory_space<vmem>>, vector<1x2x32xf32>
      %27 = vector.shape_cast %26 : vector<1x2x32xf32> to vector<2x32xf32>
      %28 = vector.shape_cast %25 : vector<2x32xf32> to vector<1x2x32xf32>
      tpu.vector_store %arg4[%c0_15, %c0_16, %c0_17], %28 {strides = array<i32>} : memref<1x2x32xf32, #tpu.memory_space<vmem>>, vector<1x2x32xf32>,
    } else {
    }
    return
  }
  func.func @transform_0(%arg0: i32, %arg1: i32) -> (i32, i32, i32) {
    %c1_i32 = arith.constant 1 : i32
    %0 = arith.muli %arg0, %c1_i32 : i32
    %1 = arith.addi %0, %arg1 : i32
    %c0_i32 = arith.constant 0 : i32
    %c0_i32_0 = arith.constant 0 : i32
    %c0_i32_1 = arith.constant 0 : i32
    return %c0_i32, %1, %c0_i32_0 : i32, i32, i32
  }
  func.func @transform_1(%arg0: i32, %arg1: i32) -> (i32, i32, i32) {
    %c0_i32 = arith.constant 0 : i32
    %c0_i32_0 = arith.constant 0 : i32
    %c0_i32_1 = arith.constant 0 : i32
    %c0_i32_2 = arith.constant 0 : i32
    return %c0_i32, %c0_i32_0, %c0_i32_1 : i32, i32, i32
  }
  func.func @transform_2(%arg0: i32, %arg1: i32) -> (i32, i32, i32) {
    %c0_i32 = arith.constant 0 : i32
    %c0_i32_0 = arith.constant 0 : i32
    %c0_i32_1 = arith.constant 0 : i32
    return %arg0, %c0_i32, %c0_i32_0 : i32, i32, i32
  }
}

</mosaic_0001>

<llo_original>
// kernel: tpu_custom_call.1
$region0: #{tpu_custom_call.1}
  #allocation0 [shape = 'u32[]', space=smem, size = 0x4, offset = 0x4, fixed_abs, tag = 'smem constant byte address 0x4 - core index']
  #allocation1 [shape = 'u32[72,128]{1,0:T(1,128)}', space=vmem, size = 0x9000, scoped, tag = 'internal scratch']
  #allocation2 [shape = 'f32[2,32]{1,0:T(2,128)}', space=vmem, size = 0x400, scoped, tag = 'scratch operand']
  %s0 = inlined_call_operand.hbm [shape: bf16[2,16,32], index: 0, kind: input, shape index: {}]
  %s1 = inlined_call_operand.vmem [shape: s32[2,1,1], index: 1, kind: input, shape index: {}]
  %s2 = inlined_call_operand.hbm [shape: f32[1,2,32], index: 2, kind: output, shape index: {}]
  %s3 = sld [smem:[#allocation0]]
  $region30: #{tpu_custom_call.1} parent=0
    _
  %s5 = ssub.s32 1, %s3
  %s6 = scalar_select 0, %s5, %s3
  $region1: #{tpu_custom_call.1} parent=0
    #allocation3 [shape = 'u8[8192]{0}', space=vmem, size = 0x2000, scoped, tag = 'input window, operand 0, single buffered']
    #allocation4 [shape = 's32[1]{0}', space=sflag, size = 0x4, scoped, tag = 'scoped memory for tpu_custom_call.1']
    #allocation5 [shape = 's32[1]{0}', space=sflag, size = 0x4, scoped, tag = 'scoped memory for tpu_custom_call.1']
    #allocation6 [shape = 'u8[1024]{0}', space=vmem, size = 0x400, scoped, tag = 'output window, operand 0, single buffered']
    %7 = vsyncpa [#allocation4], 0
    %8 = vsyncpa [#allocation5], 0
    // Predicated region
    $region2: #{tpu_custom_call.1} parent=1 // pred_check
      _
    $region3: #{tpu_custom_call.1} parent=1 // pred_check_branch
      %10 = sbr.rel (0) target = $region5
    $region4: #{tpu_custom_call.1} parent=1 // pred_region
      %s11 = sadd.s32 0, 0
      %s12 = smul.u32 2, %s11
      %14 = vsyncadd [#allocation4], 0
      %s15 = smul.addr %s12, 4
      %s16 = scalar_lea.hbm %s0, %s15
      %s17 = sshll.u32 %s16, 4
      %s18 = int_to_ptr.hbm [resolvable:$true] %s17
      %s19 = sshll.u32 [#allocation3], 4
      %s20 = int_to_ptr.vmem [resolvable:$true] %s19
      %25 = dma.hbm_to_vmem [thread:$0]  %s18, 256, %s20, [#allocation4], 64, 64, 4
    $region5: #{tpu_custom_call.1} parent=1 // pred_fallthru
      _
    // Predicated region
    $region6: #{tpu_custom_call.1} parent=1 // pred_check
      _
    $region7: #{tpu_custom_call.1} parent=1 // pred_check_branch
      %27 = sbr.rel (0) target = $region9
    $region8: #{tpu_custom_call.1} parent=1 // pred_region
      _
    $region9: #{tpu_custom_call.1} parent=1 // pred_fallthru
      _
    // Predicated region
    $region10: #{tpu_custom_call.1} parent=1 // pred_check
      _
    $region11: #{tpu_custom_call.1} parent=1 // pred_check_branch
      %29 = sbr.rel (0) target = $region13
    $region12: #{tpu_custom_call.1} parent=1 // pred_region
      %31 = dma.done [#allocation4], 256
    $region13: #{tpu_custom_call.1} parent=1 // pred_fallthru
      _
    %s32 = sadd.s32 0, 0
    %s33 = smul.u32 2, %s32
    %p34 = scmp.eq.s32.totalorder 0, 0
    // Predicated region
    $region14: #{tpu_custom_call.1} parent=1 // pred_check
      %p35 = pneg %p34
    $region15: #{tpu_custom_call.1} parent=1 // pred_check_branch
      %37 = sbr.rel (%p35) target = $region17
    $region16: #{tpu_custom_call.1} parent=1 // pred_region
      %vm38 = vcmask 254976
      %39 = vst.msk [vmem:[#allocation2] sm:$0x3] %vm38, 0.0
    $region17: #{tpu_custom_call.1} parent=1 // pred_fallthru
      _
    %s40 = sadd.s32 0, 0
    %s41 = smul.u32 %s40, 16
    %v42 = vlaneseq
    %v43 = vshrl.u32 %v42, 7
    %v44 = vadd.s32 %v43, 8
    %v45 = vstv %s41
    %v46 = vadd.s32 %v45, %v43
    %v47 = vadd.s32 %v45, %v44
    %v48 = vld [vmem:[%s1] sm:$0x1]
    %v49 = vld [vmem:[%s1 + $0x1] sm:$0x1]
    %v50 = vperm.slane %v48, 0
    %v51 = vperm.slane %v49, 0
    %vm52 = vcmp.lt.s32.totalorder %v46, %v50
    %vm53 = vcmp.lt.s32.totalorder %v47, %v50
    %vm54 = vcmp.lt.s32.totalorder %v46, %v51
    %vm55 = vcmp.lt.s32.totalorder %v47, %v51
    %v56 = vld [vmem:[#allocation3] sm:$0xf]
    %v57 = vld [vmem:[#allocation3 + $0x4] sm:$0xf]
    %v58 = vld [vmem:[#allocation3 + $0x8] sm:$0xf]
    %v59 = vld [vmem:[#allocation3 + $0xc] sm:$0xf]
    %v60 = vunpack.c.l.bf16 %v56
    %v61 = vunpack.c.l.bf16 %v57
    %v62 = vunpack.c.l.bf16 %v58
    %v63 = vunpack.c.l.bf16 %v59
    %v64 = vsel %vm52, 1, 0
    %v65 = vsel %vm53, 1, 0
    %v66 = vsel %vm54, 1, 0
    %v67 = vsel %vm55, 1, 0
    %68 = vset.pattern.permute.xlu0 0
    %69 = vperm.xlu0 %68, %v64
    %v70 = vpop.permute.xlu0 %69
    %71 = vset.pattern.permute.xlu0 0
    %72 = vperm.xlu0 %71, %v65
    %v73 = vpop.permute.xlu0 %72
    %74 = vset.pattern.permute.xlu0 0
    %75 = vperm.xlu0 %74, %v66
    %v76 = vpop.permute.xlu0 %75
    %77 = vset.pattern.permute.xlu0 0
    %78 = vperm.xlu0 %77, %v67
    %v79 = vpop.permute.xlu0 %78
    %vm80 = vcmp.eq.s32.totalorder %v70, 1
    %vm81 = vcmp.eq.s32.totalorder %v73, 1
    %vm82 = vcmp.eq.s32.totalorder %v76, 1
    %vm83 = vcmp.eq.s32.totalorder %v79, 1
    %v84 = vsel %vm80, %v60, 0.0
    %v85 = vsel %vm81, %v61, 0.0
    %v86 = vsel %vm82, %v62, 0.0
    %v87 = vsel %vm83, %v63, 0.0
    %v88 = vld [vmem:[#allocation2] sm:$0x3]
    %vm89 = vcmask 261120
    %v90 = vsel %vm89, %v84, 0.0
    %v91 = vsel %vm89, %v85, 0.0
    %v92 = vadd.f32 %v90, %v91
    %v93 = vrot.slane %v92, 4
    %v94 = vadd.f32 %v92, %v93
    %v95 = vrot.slane %v94, 2
    %v96 = vadd.f32 %v94, %v95
    %v97 = vrot.slane %v96, 1
    %v98 = vadd.f32 %v96, %v97
    %v99 = vsel %vm89, %v86, 0.0
    %v100 = vsel %vm89, %v87, 0.0
    %v101 = vadd.f32 %v99, %v100
    %v102 = vrot.slane %v101, 4
    %v103 = vadd.f32 %v101, %v102
    %v104 = vrot.slane %v103, 2
    %v105 = vadd.f32 %v103, %v104
    %v106 = vrot.slane %v105, 1
    %v107 = vadd.f32 %v105, %v106
    %vm110 = vcmask 1041409
    %v111 = vsel %vm110, %v107, %v98
    %v113 = vadd.f32 %v88, %v111
    %vm114 = vcmask 254976
    %115 = vst.msk [vmem:[#allocation2] sm:$0x3] %vm114, %v113
    // Predicated region
    $region18: #{tpu_custom_call.1} parent=1 // pred_check
      %p116 = pneg %p34
    $region19: #{tpu_custom_call.1} parent=1 // pred_check_branch
      %118 = sbr.rel (%p116) target = $region21
    $region20: #{tpu_custom_call.1} parent=1 // pred_region
      %v119 = vld [vmem:[#allocation2] sm:$0x3]
      %120 = vst.msk [vmem:[#allocation6] sm:$0x3] %vm114, %v119
    $region21: #{tpu_custom_call.1} parent=1 // pred_fallthru
      _
    // Predicated region
    $region22: #{tpu_custom_call.1} parent=1 // pred_check
      _
    $region23: #{tpu_custom_call.1} parent=1 // pred_check_branch
      %122 = sbr.rel (0) target = $region25
    $region24: #{tpu_custom_call.1} parent=1 // pred_region
      %124 = vsyncadd [#allocation5], 0
      %s126 = sshll.u32 [#allocation6], 4
      %s127 = int_to_ptr.vmem [resolvable:$true] %s126
      %s128 = sshll.u32 %s2, 4
      %s129 = int_to_ptr.hbm [resolvable:$true] %s128
      %131 = dma.vmem_to_hbm [thread:$0]  %s127, 32, %s129, [#allocation5]
    $region25: #{tpu_custom_call.1} parent=1 // pred_fallthru
      _
    // Predicated region
    $region26: #{tpu_custom_call.1} parent=1 // pred_check
      _
    $region27: #{tpu_custom_call.1} parent=1 // pred_check_branch
      %133 = sbr.rel (0) target = $region29
    $region28: #{tpu_custom_call.1} parent=1 // pred_region
      %135 = dma.done [#allocation5], 32
    $region29: #{tpu_custom_call.1} parent=1 // pred_fallthru
      _
    %136 = vsyncpa [#allocation4], 1
    %137 = vsyncpa [#allocation5], 1

</llo_original>
